<compile_context>
chip_gen: v7x
topology: tpu7x:2x2x1
jax: 0.10.0
libtpu: 0.0.40
codegen_flags: <defaults>
</compile_context>

<pallas_src>
import numpy as np
import jax
import jax.numpy as jnp
from jax.experimental import pallas as pl
from jax.experimental.pallas import tpu as pltpu

# ---------------------------------------------------------------------------
# beta from the PyTorch module (all entries 0.1) and the derived coefficients,
# computed once in double-precision Python so the kernel only multiplies.
# ---------------------------------------------------------------------------
B0 = B1 = B2 = B3 = B4 = 0.1

_C5 = 1.0 / (B0 ** 5 * 6.0)
_C4 = 1.0 / (B0 ** 4 * 5.0)
_C3 = 1.0 / (B0 ** 3 * 4.0)
_C2 = 1.0 / (B0 ** 2 * 3.0)
_C1 = 1.0 / (B0 * 2.0)

_K45 = 4.0 * B1 / B0
_K34 = 3.0 * B1 / B0
_K35 = 3.0 * (B2 / B0 + B1 ** 2 / B0 ** 2)
_K23 = 2.0 * B1 / B0
_K24 = 2.0 * B2 / B0 + B1 ** 2 / B0 ** 2
_K25 = 2.0 * (B3 / B0 + B1 * B2 / B0 ** 2)
_K12 = B1 / B0
_K13 = B2 / B0
_K14 = B3 / B0
_K15 = B4 / B0

_Y2_2 = B0 ** 2 / 2.0
_Y3_2 = B0 * B1
_Y3_3 = B0 ** 3 / 6.0
_Y4_2 = B0 * B2 + B1 ** 2 / 2.0
_Y4_3 = B0 ** 2 * B1 / 2.0
_Y4_4 = B0 ** 4 / 24.0
_Y5_2 = B0 * B3 + B1 * B2
_Y5_3 = (B0 ** 2 * B2 + B0 * B1 ** 2) / 2.0
_Y5_4 = B0 ** 3 * B1 / 6.0
_Y5_5 = B0 ** 5 / 120.0


def _taylor_terms(f, d1, d2, d3, d4, d5, c, a, b):
    """einsum('ji,ji->i', Y, A) + f*(b-a) — pure elementwise VPU math.

    Works on arrays of any (broadcast-compatible) shape; written so the
    live temporary set stays small (powers folded into the differences,
    running accumulator for the Y·A contraction).
    """
    bc = b - c
    ac = a - c
    bc2 = bc * bc
    ac2 = ac * ac
    bc3 = bc2 * bc
    ac3 = ac2 * ac

    A5 = (bc3 * bc3 - ac3 * ac3) * _C5
    A4 = (bc2 * bc3 - ac2 * ac3) * _C4 - _K45 * A5
    A3 = (bc2 * bc2 - ac2 * ac2) * _C3 - _K34 * A4 - _K35 * A5
    A2 = (bc3 - ac3) * _C2 - _K23 * A3 - _K24 * A4 - _K25 * A5
    A1 = (bc2 - ac2) * _C1 - _K12 * A2 - _K13 * A3 - _K14 * A4 - _K15 * A5

    acc = (B0 * d1) * A1
    acc = acc + (B1 * d1 + _Y2_2 * d2) * A2
    acc = acc + (B2 * d1 + _Y3_2 * d2 + _Y3_3 * d3) * A3
    acc = acc + (B3 * d1 + _Y4_2 * d2 + _Y4_3 * d3 + _Y4_4 * d4) * A4
    acc = acc + (B4 * d1 + _Y5_2 * d2 + _Y5_3 * d3 + _Y5_4 * d4 + _Y5_5 * d5) * A5
    return acc + f * (b - a)


# ---------------------------------------------------------------------------
# Pallas kernel: one sublane/lane-dense tile of Taylor integrals (+ prefix).
# ---------------------------------------------------------------------------
def _taylor_block_kernel(pk_ref, out_ref):
    """pk_ref : (10, SR, TL) f32, rows = [f, d1..d5, c, a, b, prefix].
    out_ref: (SR, TL) f32  =  prefix + int_over_interval(f, c, a, b)."""
    out_ref[...] = _taylor_terms(
        pk_ref[0],
        pk_ref[1], pk_ref[2], pk_ref[3], pk_ref[4], pk_ref[5],
        pk_ref[6], pk_ref[7], pk_ref[8],
    ) + pk_ref[9]


def _round_up(n, m):
    return ((n + m - 1) // m) * m


def _taylor_integral_pallas(f, ds, c, a, b, prefix=None, *,
                            tile_rows=8, tile_lanes=512):
    """Elementwise prefix + int_over_interval(f, c, a, b) via the Pallas kernel.

    f, c, a, b, prefix : (m,) float32
    ds                 : (5, m) float32 (1st..5th derivative of the model at c)
    """
    f = jnp.asarray(f, jnp.float32)
    m = int(f.shape[0])
    if prefix is None:
        prefix = jnp.zeros((m,), jnp.float32)

    slots = tile_rows * tile_lanes              # evaluation points per grid step
    mp = max(_round_up(m, slots), slots)        # padded slot count
    nrows = mp // tile_lanes
    grid = mp // slots

    def pad2d(v):
        v = jnp.asarray(v, jnp.float32)
        flat = jnp.zeros((mp,), jnp.float32).at[:m].set(v)
        return flat.reshape(nrows, tile_lanes)

    # One packed, sublane-dense input: a single DMA per grid step.
    packed = jnp.stack(
        [pad2d(f),
         pad2d(ds[0]), pad2d(ds[1]), pad2d(ds[2]), pad2d(ds[3]), pad2d(ds[4]),
         pad2d(c), pad2d(a), pad2d(b), pad2d(prefix)],
        axis=0)                                   # (10, nrows, tile_lanes)

    out = pl.pallas_call(
        _taylor_block_kernel,
        out_shape=jax.ShapeDtypeStruct((nrows, tile_lanes), jnp.float32),
        grid=(grid,),
        in_specs=[pl.BlockSpec((10, tile_rows, tile_lanes),
                               lambda i: (0, i, 0))],
        out_specs=pl.BlockSpec((tile_rows, tile_lanes), lambda i: (i, 0)),
        compiler_params=pltpu.CompilerParams(
            dimension_semantics=("parallel",),
            vmem_limit_bytes=32 * 1024 * 1024),
    )(packed)
    return out.reshape(-1)[:m]


# ---------------------------------------------------------------------------
# Glue: model evaluation + derivatives (trace-time jax.grad), cumsum/gather
# hoisted out of the kernel (grid-invariant, O(n_seg + m) plain JAX).
# ---------------------------------------------------------------------------
def nth_derivatives(scalar_fn, t, n):
    """1st..n-th derivative of an elementwise scalar model at points t."""
    grads = []
    fn = scalar_fn
    for _ in range(n):
        fn = jax.grad(fn)
        grads.append(jax.vmap(fn)(t))
    return jnp.stack(grads, 0)                    # (n, len(t))


def taylor_int_forward(model_scalar, x, x_min, x_max, width, *,
                       query_tile_rows=8, query_tile_lanes=512):
    width = float(width)
    x_min = float(x_min)
    x_max = float(x_max)

    # Robust interval-edge construction (host-side count, no fp-accumulated arange).
    n_seg = int(round((x_max - x_min) / width))
    edges = x_min + width * jnp.arange(n_seg + 1, dtype=jnp.float32)
    center = (edges[1:] + edges[:-1]) * 0.5
    a_seg = edges[:-1]
    b_seg = edges[1:]

    # model(center) and its 1st..5th derivatives (trace-time jax.grad glue).
    f_seg = jax.vmap(model_scalar)(center)
    ds_seg = nth_derivatives(model_scalar, center, 5)

    # Per-segment integrals: ONE small Pallas call (grid=1), done once.
    int_vals = _taylor_integral_pallas(f_seg, ds_seg, center, a_seg, b_seg,
                                       tile_rows=8, tile_lanes=128)

    # Exclusive cumulative table + per-query prefix gather (tiny, plain JAX).
    cumz = jnp.concatenate([jnp.zeros((1,), jnp.float32),
                            jnp.cumsum(int_vals)])

    # Query-side precompute (discrete=False branch); matches the PyTorch
    # module: a = x - x % width, idx = a / width (assumes x_min == 0).
    x = jnp.asarray(x, jnp.float32)
    a = x - jnp.mod(x, width)
    idx = jnp.clip(jnp.round(a / width).astype(jnp.int32), 0, n_seg)
    prefix = cumz[idx]

    c = (a + x) * 0.5
    fc = jax.vmap(model_scalar)(c)
    ds_c = nth_derivatives(model_scalar, c, 5)

    # Main Pallas call: prefix + int_over_interval(fc, c, a, x), sublane/lane
    # dense tiles, one packed DMA per step, parallel grid over query blocks.
    return _taylor_integral_pallas(fc, ds_c, c, a, x, prefix=prefix,
                                   tile_rows=query_tile_rows,
                                   tile_lanes=query_tile_lanes)


def forward_ref(model_scalar, x, x_min, x_max, width):
    """Pure-JAX reference mirroring the PyTorch forward (discrete=False)."""
    width = float(width)
    x_min = float(x_min)
    x_max = float(x_max)
    n_seg = int(round((x_max - x_min) / width))
    edges = x_min + width * jnp.arange(n_seg + 1, dtype=jnp.float32)
    center = (edges[1:] + edges[:-1]) * 0.5
    f = jax.vmap(model_scalar)(center)
    ds = nth_derivatives(model_scalar, center, 5)
    int_vals = _taylor_terms(f, ds[0], ds[1], ds[2], ds[3], ds[4],
                             center, edges[:-1], edges[1:])
    cumz = jnp.concatenate([jnp.zeros((1,), jnp.float32),
                            jnp.cumsum(int_vals)])
    x = jnp.asarray(x, jnp.float32)
    a = x - jnp.mod(x, width)
    idx = jnp.clip(jnp.round(a / width).astype(jnp.int32), 0, n_seg)
    c = (a + x) * 0.5
    fc = jax.vmap(model_scalar)(c)
    dsc = nth_derivatives(model_scalar, c, 5)
    int_x = _taylor_terms(fc, dsc[0], dsc[1], dsc[2], dsc[3], dsc[4], c, a, x)
    return cumz[idx] + int_x


if __name__ == "__main__":
    x_min, x_max, width = 0.0, 1.6, 0.1          # 17 interval edges, 16 cells

    key = jax.random.PRNGKey(0)
    kw1, kb1, kw2, kx = jax.random.split(key, 4)
    # deterministic tiny elementwise model: t -> sum_h w2[h] * tanh(w1[h]*t + b1[h])
    w1 = jax.random.normal(kw1, (8,), jnp.float32) * 0.5
    b1 = jax.random.normal(kb1, (8,), jnp.float32) * 0.1
    w2 = jax.random.normal(kw2, (8,), jnp.float32) * 0.5

    def model_scalar(t):
        return jnp.sum(w2 * jnp.tanh(w1 * t + b1))

    # query points inside [x_min, x_max)
    x = jax.random.uniform(kx, (64,), jnp.float32, minval=0.0,
                           maxval=x_max - width / 2.0)

    out = taylor_int_forward(model_scalar, x, x_min, x_max, width)
    out = jax.block_until_ready(out)

    ref = forward_ref(model_scalar, x, x_min, x_max, width)
    assert np.allclose(np.asarray(out), np.asarray(ref), rtol=1e-4, atol=1e-4), \
        (np.asarray(out), np.asarray(ref))
    print("KERNEL_OK")
</pallas_src>

<mosaic_0001>
module attributes {stable_mosaic.version = 11 : i64} {
  func.func @_taylor_block_kernel(%arg0: i32, %arg1: memref<10x8x128xf32, #tpu.memory_space<vmem>>, %arg2: memref<8x128xf32, #tpu.memory_space<vmem>>) attributes {dimension_semantics = [#tpu.dimension_semantics<parallel>], iteration_bounds = array<i64: 1>, scalar_prefetch = 0 : i64, scratch_operands = 0 : i64, tpu.core_type = #tpu.core_type<tc>, window_params = [{transform_indices = @transform_0, window_bounds = array<i64: 10, 8, 128>}, {transform_indices = @transform_1, window_bounds = array<i64: 8, 128>}]} {
    %c0 = arith.constant 0 : index
    %c0_0 = arith.constant 0 : index
    %c0_1 = arith.constant 0 : index
    %0 = vector.load %arg1[%c0, %c0_0, %c0_1] : memref<10x8x128xf32, #tpu.memory_space<vmem>>, vector<1x8x128xf32>
    %1 = vector.shape_cast %0 : vector<1x8x128xf32> to vector<8x128xf32>
    %c1 = arith.constant 1 : index
    %c0_2 = arith.constant 0 : index
    %c0_3 = arith.constant 0 : index
    %2 = vector.load %arg1[%c1, %c0_2, %c0_3] : memref<10x8x128xf32, #tpu.memory_space<vmem>>, vector<1x8x128xf32>
    %3 = vector.shape_cast %2 : vector<1x8x128xf32> to vector<8x128xf32>
    %c2 = arith.constant 2 : index
    %c0_4 = arith.constant 0 : index
    %c0_5 = arith.constant 0 : index
    %4 = vector.load %arg1[%c2, %c0_4, %c0_5] : memref<10x8x128xf32, #tpu.memory_space<vmem>>, vector<1x8x128xf32>
    %5 = vector.shape_cast %4 : vector<1x8x128xf32> to vector<8x128xf32>
    %c3 = arith.constant 3 : index
    %c0_6 = arith.constant 0 : index
    %c0_7 = arith.constant 0 : index
    %6 = vector.load %arg1[%c3, %c0_6, %c0_7] : memref<10x8x128xf32, #tpu.memory_space<vmem>>, vector<1x8x128xf32>
    %7 = vector.shape_cast %6 : vector<1x8x128xf32> to vector<8x128xf32>
    %c4 = arith.constant 4 : index
    %c0_8 = arith.constant 0 : index
    %c0_9 = arith.constant 0 : index
    %8 = vector.load %arg1[%c4, %c0_8, %c0_9] : memref<10x8x128xf32, #tpu.memory_space<vmem>>, vector<1x8x128xf32>
    %9 = vector.shape_cast %8 : vector<1x8x128xf32> to vector<8x128xf32>
    %c5 = arith.constant 5 : index
    %c0_10 = arith.constant 0 : index
    %c0_11 = arith.constant 0 : index
    %10 = vector.load %arg1[%c5, %c0_10, %c0_11] : memref<10x8x128xf32, #tpu.memory_space<vmem>>, vector<1x8x128xf32>
    %11 = vector.shape_cast %10 : vector<1x8x128xf32> to vector<8x128xf32>
    %c6 = arith.constant 6 : index
    %c0_12 = arith.constant 0 : index
    %c0_13 = arith.constant 0 : index
    %12 = vector.load %arg1[%c6, %c0_12, %c0_13] : memref<10x8x128xf32, #tpu.memory_space<vmem>>, vector<1x8x128xf32>
    %13 = vector.shape_cast %12 : vector<1x8x128xf32> to vector<8x128xf32>
    %c7 = arith.constant 7 : index
    %c0_14 = arith.constant 0 : index
    %c0_15 = arith.constant 0 : index
    %14 = vector.load %arg1[%c7, %c0_14, %c0_15] : memref<10x8x128xf32, #tpu.memory_space<vmem>>, vector<1x8x128xf32>
    %15 = vector.shape_cast %14 : vector<1x8x128xf32> to vector<8x128xf32>
    %c8 = arith.constant 8 : index
    %c0_16 = arith.constant 0 : index
    %c0_17 = arith.constant 0 : index
    %16 = vector.load %arg1[%c8, %c0_16, %c0_17] : memref<10x8x128xf32, #tpu.memory_space<vmem>>, vector<1x8x128xf32>
    %17 = vector.shape_cast %16 : vector<1x8x128xf32> to vector<8x128xf32>
    %18 = arith.subf %17, %13 : vector<8x128xf32>
    %19 = arith.subf %15, %13 : vector<8x128xf32>
    %20 = arith.mulf %18, %18 : vector<8x128xf32>
    %21 = arith.mulf %19, %19 : vector<8x128xf32>
    %22 = arith.mulf %20, %18 : vector<8x128xf32>
    %23 = arith.mulf %21, %19 : vector<8x128xf32>
    %24 = arith.mulf %22, %22 : vector<8x128xf32>
    %25 = arith.mulf %23, %23 : vector<8x128xf32>
    %26 = arith.subf %24, %25 : vector<8x128xf32>
    %cst = arith.constant 16666.666 : f32
    %27 = vector.broadcast %cst : f32 to vector<8x128xf32>
    %28 = arith.mulf %26, %27 : vector<8x128xf32>
    %29 = arith.mulf %20, %22 : vector<8x128xf32>
    %30 = arith.mulf %21, %23 : vector<8x128xf32>
    %31 = arith.subf %29, %30 : vector<8x128xf32>
    %cst_18 = arith.constant 2.000000e+03 : f32
    %32 = vector.broadcast %cst_18 : f32 to vector<8x128xf32>
    %33 = arith.mulf %31, %32 : vector<8x128xf32>
    %cst_19 = arith.constant 4.000000e+00 : f32
    %34 = vector.broadcast %cst_19 : f32 to vector<8x128xf32>
    %35 = arith.mulf %34, %28 : vector<8x128xf32>
    %36 = arith.subf %33, %35 : vector<8x128xf32>
    %37 = arith.mulf %20, %20 : vector<8x128xf32>
    %38 = arith.mulf %21, %21 : vector<8x128xf32>
    %39 = arith.subf %37, %38 : vector<8x128xf32>
    %cst_20 = arith.constant 2.500000e+02 : f32
    %40 = vector.broadcast %cst_20 : f32 to vector<8x128xf32>
    %41 = arith.mulf %39, %40 : vector<8x128xf32>
    %cst_21 = arith.constant 3.000000e+00 : f32
    %42 = vector.broadcast %cst_21 : f32 to vector<8x128xf32>
    %43 = arith.mulf %42, %36 : vector<8x128xf32>
    %44 = arith.subf %41, %43 : vector<8x128xf32>
    %cst_22 = arith.constant 6.000000e+00 : f32
    %45 = vector.broadcast %cst_22 : f32 to vector<8x128xf32>
    %46 = arith.mulf %45, %28 : vector<8x128xf32>
    %47 = arith.subf %44, %46 : vector<8x128xf32>
    %48 = arith.subf %22, %23 : vector<8x128xf32>
    %cst_23 = arith.constant 33.3333321 : f32
    %49 = vector.broadcast %cst_23 : f32 to vector<8x128xf32>
    %50 = arith.mulf %48, %49 : vector<8x128xf32>
    %cst_24 = arith.constant 2.000000e+00 : f32
    %51 = vector.broadcast %cst_24 : f32 to vector<8x128xf32>
    %52 = arith.mulf %51, %47 : vector<8x128xf32>
    %53 = arith.subf %50, %52 : vector<8x128xf32>
    %cst_25 = arith.constant 3.000000e+00 : f32
    %54 = vector.broadcast %cst_25 : f32 to vector<8x128xf32>
    %55 = arith.mulf %54, %36 : vector<8x128xf32>
    %56 = arith.subf %53, %55 : vector<8x128xf32>
    %cst_26 = arith.constant 4.000000e+00 : f32
    %57 = vector.broadcast %cst_26 : f32 to vector<8x128xf32>
    %58 = arith.mulf %57, %28 : vector<8x128xf32>
    %59 = arith.subf %56, %58 : vector<8x128xf32>
    %60 = arith.subf %20, %21 : vector<8x128xf32>
    %cst_27 = arith.constant 5.000000e+00 : f32
    %61 = vector.broadcast %cst_27 : f32 to vector<8x128xf32>
    %62 = arith.mulf %60, %61 : vector<8x128xf32>
    %cst_28 = arith.constant 1.000000e+00 : f32
    %63 = vector.broadcast %cst_28 : f32 to vector<8x128xf32>
    %64 = arith.mulf %63, %59 : vector<8x128xf32>
    %65 = arith.subf %62, %64 : vector<8x128xf32>
    %cst_29 = arith.constant 1.000000e+00 : f32
    %66 = vector.broadcast %cst_29 : f32 to vector<8x128xf32>
    %67 = arith.mulf %66, %47 : vector<8x128xf32>
    %68 = arith.subf %65, %67 : vector<8x128xf32>
    %cst_30 = arith.constant 1.000000e+00 : f32
    %69 = vector.broadcast %cst_30 : f32 to vector<8x128xf32>
    %70 = arith.mulf %69, %36 : vector<8x128xf32>
    %71 = arith.subf %68, %70 : vector<8x128xf32>
    %cst_31 = arith.constant 1.000000e+00 : f32
    %72 = vector.broadcast %cst_31 : f32 to vector<8x128xf32>
    %73 = arith.mulf %72, %28 : vector<8x128xf32>
    %74 = arith.subf %71, %73 : vector<8x128xf32>
    %cst_32 = arith.constant 1.000000e-01 : f32
    %75 = vector.broadcast %cst_32 : f32 to vector<8x128xf32>
    %76 = arith.mulf %75, %3 : vector<8x128xf32>
    %77 = arith.mulf %76, %74 : vector<8x128xf32>
    %cst_33 = arith.constant 1.000000e-01 : f32
    %78 = vector.broadcast %cst_33 : f32 to vector<8x128xf32>
    %79 = arith.mulf %78, %3 : vector<8x128xf32>
    %cst_34 = arith.constant 5.000000e-03 : f32
    %80 = vector.broadcast %cst_34 : f32 to vector<8x128xf32>
    %81 = arith.mulf %80, %5 : vector<8x128xf32>
    %82 = arith.addf %79, %81 : vector<8x128xf32>
    %83 = arith.mulf %82, %59 : vector<8x128xf32>
    %84 = arith.addf %77, %83 : vector<8x128xf32>
    %cst_35 = arith.constant 1.000000e-01 : f32
    %85 = vector.broadcast %cst_35 : f32 to vector<8x128xf32>
    %86 = arith.mulf %85, %3 : vector<8x128xf32>
    %cst_36 = arith.constant 0.00999999977 : f32
    %87 = vector.broadcast %cst_36 : f32 to vector<8x128xf32>
    %88 = arith.mulf %87, %5 : vector<8x128xf32>
    %89 = arith.addf %86, %88 : vector<8x128xf32>
    %cst_37 = arith.constant 1.66666665E-4 : f32
    %90 = vector.broadcast %cst_37 : f32 to vector<8x128xf32>
    %91 = arith.mulf %90, %7 : vector<8x128xf32>
    %92 = arith.addf %89, %91 : vector<8x128xf32>
    %93 = arith.mulf %92, %47 : vector<8x128xf32>
    %94 = arith.addf %84, %93 : vector<8x128xf32>
    %cst_38 = arith.constant 1.000000e-01 : f32
    %95 = vector.broadcast %cst_38 : f32 to vector<8x128xf32>
    %96 = arith.mulf %95, %3 : vector<8x128xf32>
    %cst_39 = arith.constant 1.500000e-02 : f32
    %97 = vector.broadcast %cst_39 : f32 to vector<8x128xf32>
    %98 = arith.mulf %97, %5 : vector<8x128xf32>
    %99 = arith.addf %96, %98 : vector<8x128xf32>
    %cst_40 = arith.constant 5.000000e-04 : f32
    %100 = vector.broadcast %cst_40 : f32 to vector<8x128xf32>
    %101 = arith.mulf %100, %7 : vector<8x128xf32>
    %102 = arith.addf %99, %101 : vector<8x128xf32>
    %cst_41 = arith.constant 4.16666671E-6 : f32
    %103 = vector.broadcast %cst_41 : f32 to vector<8x128xf32>
    %104 = arith.mulf %103, %9 : vector<8x128xf32>
    %105 = arith.addf %102, %104 : vector<8x128xf32>
    %106 = arith.mulf %105, %36 : vector<8x128xf32>
    %107 = arith.addf %94, %106 : vector<8x128xf32>
    %cst_42 = arith.constant 1.000000e-01 : f32
    %108 = vector.broadcast %cst_42 : f32 to vector<8x128xf32>
    %109 = arith.mulf %108, %3 : vector<8x128xf32>
    %cst_43 = arith.constant 2.000000e-02 : f32
    %110 = vector.broadcast %cst_43 : f32 to vector<8x128xf32>
    %111 = arith.mulf %110, %5 : vector<8x128xf32>
    %112 = arith.addf %109, %111 : vector<8x128xf32>
    %cst_44 = arith.constant 1.000000e-03 : f32
    %113 = vector.broadcast %cst_44 : f32 to vector<8x128xf32>
    %114 = arith.mulf %113, %7 : vector<8x128xf32>
    %115 = arith.addf %112, %114 : vector<8x128xf32>
    %cst_45 = arith.constant 1.66666669E-5 : f32
    %116 = vector.broadcast %cst_45 : f32 to vector<8x128xf32>
    %117 = arith.mulf %116, %9 : vector<8x128xf32>
    %118 = arith.addf %115, %117 : vector<8x128xf32>
    %cst_46 = arith.constant 8.33333331E-8 : f32
    %119 = vector.broadcast %cst_46 : f32 to vector<8x128xf32>
    %120 = arith.mulf %119, %11 : vector<8x128xf32>
    %121 = arith.addf %118, %120 : vector<8x128xf32>
    %122 = arith.mulf %121, %28 : vector<8x128xf32>
    %123 = arith.addf %107, %122 : vector<8x128xf32>
    %124 = arith.subf %17, %15 : vector<8x128xf32>
    %125 = arith.mulf %1, %124 : vector<8x128xf32>
    %126 = arith.addf %123, %125 : vector<8x128xf32>
    %c9 = arith.constant 9 : index
    %c0_47 = arith.constant 0 : index
    %c0_48 = arith.constant 0 : index
    %127 = vector.load %arg1[%c9, %c0_47, %c0_48] : memref<10x8x128xf32, #tpu.memory_space<vmem>>, vector<1x8x128xf32>
    %128 = vector.shape_cast %127 : vector<1x8x128xf32> to vector<8x128xf32>
    %129 = arith.addf %126, %128 : vector<8x128xf32>
    %c0_49 = arith.constant 0 : index
    %c0_50 = arith.constant 0 : index
    %130 = vector.load %arg2[%c0_49, %c0_50] : memref<8x128xf32, #tpu.memory_space<vmem>>, vector<8x128xf32>
    tpu.vector_store %arg2[%c0_49, %c0_50], %129 {strides = array<i32>} : memref<8x128xf32, #tpu.memory_space<vmem>>, vector<8x128xf32>,
    return
  }
  func.func @transform_0(%arg0: i32) -> (i32, i32, i32) {
    %c0_i32 = arith.constant 0 : i32
    %c0_i32_0 = arith.constant 0 : i32
    %c0_i32_1 = arith.constant 0 : i32
    return %c0_i32, %arg0, %c0_i32_0 : i32, i32, i32
  }
  func.func @transform_1(%arg0: i32) -> (i32, i32) {
    %c0_i32 = arith.constant 0 : i32
    %c0_i32_0 = arith.constant 0 : i32
    return %arg0, %c0_i32 : i32, i32
  }
}

</mosaic_0001>

<llo_original>
// kernel: tpu_custom_call.1
$region0: #{tpu_custom_call.1}
  #allocation0 [shape = 'u32[]', space=smem, size = 0x4, offset = 0x4, fixed_abs, tag = 'smem constant byte address 0x4 - core index']
  #allocation1 [shape = 'u32[144,128]{1,0:T(1,128)}', space=vmem, size = 0x12000, scoped, tag = 'internal scratch']
  %s0 = inlined_call_operand.hbm [shape: f32[10,8,128], index: 0, kind: input, shape index: {}]
  %s1 = inlined_call_operand.hbm [shape: f32[8,128], index: 1, kind: output, shape index: {}]
  %s2 = sld [smem:[#allocation0]]
  $region18: #{tpu_custom_call.1} parent=0
    _
  %s4 = ssub.s32 1, %s2
  %s5 = scalar_select 0, %s4, %s2
  $region1: #{tpu_custom_call.1} parent=0
    #allocation2 [shape = 'u8[40960]{0}', space=vmem, size = 0xa000, scoped, tag = 'input window, operand 0, single buffered']
    #allocation3 [shape = 's32[1]{0}', space=sflag, size = 0x4, scoped, tag = 'scoped memory for tpu_custom_call.1']
    #allocation4 [shape = 's32[1]{0}', space=sflag, size = 0x4, scoped, tag = 'scoped memory for tpu_custom_call.1']
    #allocation5 [shape = 'u8[4096]{0}', space=vmem, size = 0x1000, scoped, tag = 'output window, operand 0, single buffered']
    %6 = vsyncpa [#allocation3], 0
    %7 = vsyncpa [#allocation4], 0
    // Predicated region
    $region2: #{tpu_custom_call.1} parent=1 // pred_check
      _
    $region3: #{tpu_custom_call.1} parent=1 // pred_check_branch
      %9 = sbr.rel (0) target = $region5
    $region4: #{tpu_custom_call.1} parent=1 // pred_region
      %s11 = ssub.s32 1280, 1280
      %12 = vsyncadd [#allocation3], %s11
      %s13 = sshll.u32 [#allocation2], 4
      %s14 = int_to_ptr.vmem [resolvable:$true] %s13
      %19 = dma.hbm_to_vmem [thread:$0]  %s0, 1280, %s14, [#allocation3], 128, 128, 8
    $region5: #{tpu_custom_call.1} parent=1 // pred_fallthru
      _
    // Predicated region
    $region6: #{tpu_custom_call.1} parent=1 // pred_check
      _
    $region7: #{tpu_custom_call.1} parent=1 // pred_check_branch
      %21 = sbr.rel (0) target = $region9
    $region8: #{tpu_custom_call.1} parent=1 // pred_region
      %22 = dma.done [#allocation3], 1280
    $region9: #{tpu_custom_call.1} parent=1 // pred_fallthru
      _
    %v23 = vld [vmem:[#allocation2] sm:$0xff]
    %s24 = scalar_lea.vmem [#allocation2], 8
    %v25 = vld [vmem:[%s24] sm:$0xff]
    %s26 = scalar_lea.vmem [#allocation2], 16
    %v27 = vld [vmem:[%s26] sm:$0xff]
    %s28 = scalar_lea.vmem [#allocation2], 24
    %v29 = vld [vmem:[%s28] sm:$0xff]
    %s30 = scalar_lea.vmem [#allocation2], 32
    %v31 = vld [vmem:[%s30] sm:$0xff]
    %s32 = scalar_lea.vmem [#allocation2], 40
    %v33 = vld [vmem:[%s32] sm:$0xff]
    %s34 = scalar_lea.vmem [#allocation2], 48
    %v35 = vld [vmem:[%s34] sm:$0xff]
    %s36 = scalar_lea.vmem [#allocation2], 56
    %v37 = vld [vmem:[%s36] sm:$0xff]
    %s38 = scalar_lea.vmem [#allocation2], 64
    %v39 = vld [vmem:[%s38] sm:$0xff]
    %v40 = vsub.f32 %v39, %v35
    %v41 = vsub.f32 %v37, %v35
    %v42 = vmul.f32 %v40, %v40
    %v43 = vmul.f32 %v41, %v41
    %v44 = vmul.f32 %v42, %v40
    %v45 = vmul.f32 %v43, %v41
    %v46 = vmul.f32 %v44, %v44
    %v47 = vmul.f32 %v45, %v45
    %v48 = vsub.f32 %v46, %v47
    %v49 = vmul.f32 %v48, 16666.666
    %v50 = vmul.f32 %v42, %v44
    %v51 = vmul.f32 %v43, %v45
    %v52 = vsub.f32 %v50, %v51
    %v53 = vmul.f32 %v52, 2000.0
    %v54 = vmul.f32 %v49, 4.0
    %v55 = vsub.f32 %v53, %v54
    %v56 = vmul.f32 %v42, %v42
    %v57 = vmul.f32 %v43, %v43
    %v58 = vsub.f32 %v56, %v57
    %v59 = vmul.f32 %v58, 250.0
    %v60 = vmul.f32 %v55, 3.0
    %v61 = vsub.f32 %v59, %v60
    %v62 = vmul.f32 %v49, 6.0
    %v63 = vsub.f32 %v61, %v62
    %v64 = vsub.f32 %v44, %v45
    %v65 = vmul.f32 %v64, 33.333332
    %v66 = vmul.f32 %v63, 2.0
    %v67 = vsub.f32 %v65, %v66
    %v68 = vsub.f32 %v67, %v60
    %v69 = vsub.f32 %v68, %v54
    %v70 = vsub.f32 %v42, %v43
    %v71 = vmul.f32 %v70, 5.0
    %v72 = vsub.f32 %v71, %v69
    %v73 = vsub.f32 %v72, %v63
    %v74 = vsub.f32 %v73, %v55
    %v75 = vsub.f32 %v74, %v49
    %v76 = vmul.f32 %v25, 0.1
    %v77 = vmul.f32 %v76, %v75
    %v78 = vmul.f32 %v27, 0.005
    %v79 = vadd.f32 %v76, %v78
    %v80 = vmul.f32 %v79, %v69
    %v81 = vadd.f32 %v77, %v80
    %v82 = vmul.f32 %v27, 0.01
    %v83 = vadd.f32 %v76, %v82
    %v84 = vmul.f32 %v29, 0.00016666666
    %v85 = vadd.f32 %v83, %v84
    %v86 = vmul.f32 %v85, %v63
    %v87 = vadd.f32 %v81, %v86
    %v88 = vmul.f32 %v27, 0.015
    %v89 = vadd.f32 %v76, %v88
    %v90 = vmul.f32 %v29, 0.0005
    %v91 = vadd.f32 %v89, %v90
    %v92 = vmul.f32 %v31, 4.1666667e-06
    %v93 = vadd.f32 %v91, %v92
    %v94 = vmul.f32 %v93, %v55
    %v95 = vadd.f32 %v87, %v94
    %v96 = vmul.f32 %v27, 0.02
    %v97 = vadd.f32 %v76, %v96
    %v98 = vmul.f32 %v29, 0.001
    %v99 = vadd.f32 %v97, %v98
    %v100 = vmul.f32 %v31, 1.6666667e-05
    %v101 = vadd.f32 %v99, %v100
    %v102 = vmul.f32 %v33, 8.333333e-08
    %v103 = vadd.f32 %v101, %v102
    %v104 = vmul.f32 %v103, %v49
    %v105 = vadd.f32 %v95, %v104
    %v106 = vsub.f32 %v39, %v37
    %v107 = vmul.f32 %v23, %v106
    %v108 = vadd.f32 %v105, %v107
    %s109 = scalar_lea.vmem [#allocation2], 72
    %v110 = vld [vmem:[%s109] sm:$0xff]
    %v111 = vadd.f32 %v108, %v110
    %112 = vst [vmem:[#allocation5] sm:$0xff] %v111
    // Predicated region
    $region10: #{tpu_custom_call.1} parent=1 // pred_check
      _
    $region11: #{tpu_custom_call.1} parent=1 // pred_check_branch
      %114 = sbr.rel (0) target = $region13
    $region12: #{tpu_custom_call.1} parent=1 // pred_region
      %s116 = ssub.s32 128, 128
      %117 = vsyncadd [#allocation4], %s116
      %s119 = sshll.u32 [#allocation5], 4
      %s120 = int_to_ptr.vmem [resolvable:$true] %s119
      %122 = dma.vmem_to_hbm [thread:$0]  %s120, 128, %s1, [#allocation4]
    $region13: #{tpu_custom_call.1} parent=1 // pred_fallthru
      _
    // Predicated region
    $region14: #{tpu_custom_call.1} parent=1 // pred_check
      _
    $region15: #{tpu_custom_call.1} parent=1 // pred_check_branch
      %124 = sbr.rel (0) target = $region17
    $region16: #{tpu_custom_call.1} parent=1 // pred_region
      %125 = dma.done [#allocation4], 128
    $region17: #{tpu_custom_call.1} parent=1 // pred_fallthru
      _
    %126 = vsyncpa [#allocation3], 1
    %127 = vsyncpa [#allocation4], 1

</llo_original>
